<compile_context>
chip_gen: v7x
topology: tpu7x:2x2x1
jax: 0.10.0
libtpu: 0.0.40
codegen_flags: <defaults>
</compile_context>

<pallas_src>
import numpy as np

import jax
import jax.numpy as jnp
from jax import lax
from jax.experimental import pallas as pl
from jax.experimental.pallas import tpu as pltpu

GRD_BOTTOM = 1.0 / 1023.0
GRD_UP = 4.0 / 1023.0
HALF = 0.5 / 1023.0
BIG = 1e4                       # kornia morphology max_val (geodesic border)
ONE_THIRD = 1.0 / 3.0
INV_GRD_UP = 1.0 / GRD_UP
HALO = 5                        # 3 (gradient taps) + 1 (dilation) + 1 (erosion)


# ----------------------------------------------------------------------------
# Shared per-tile math.  The Pallas kernel and the pure-JAX reference both call
# this, differing only in how lane (W) shifts are realized.
#   x_pad : (..., R + 2*HALO, W)  input rows [row0, row0 + R + 2*HALO) in image
#           row coordinates, zero-filled outside [0, h_img)
#   wshift(a, s, fill): a shifted by s along the last axis, positions whose
#           source column falls outside the real image replaced by `fill`
# Returns closing(gradmap) for the R rows [row0 + HALO, row0 + HALO + R).
# ----------------------------------------------------------------------------
def _gradmap_core(x_pad, wshift, h_img, row0):
    R = x_pad.shape[-2] - 2 * HALO
    M = R + 4                                  # grad needed at output rows +-2

    def rows(a, off, num):                     # static sublane-window slice
        return a[..., off:off + num, :]

    def filter_grad(g1, g2, g3):
        gm = (g1 + g2 + g3) * ONE_THIRD
        ga = jnp.abs(g1)
        bad = (jnp.abs(g1 - gm) > HALF) | (ga < GRD_BOTTOM) | (ga > GRD_UP)
        return jnp.where(bad, 0.0, ga)

    # Horizontal gradient (W axis / lanes): central differences +-1, +-2, +-3.
    x_mid = rows(x_pad, 3, M)
    gx = filter_grad(wshift(x_mid, 1, 0.0) - wshift(x_mid, -1, 0.0),
                     wshift(x_mid, 2, 0.0) - wshift(x_mid, -2, 0.0),
                     wshift(x_mid, 3, 0.0) - wshift(x_mid, -3, 0.0))

    # Vertical gradient (H axis / sublanes): static slices of the halo'd input
    # (the zero conv padding is baked into the halo rows).
    gy = filter_grad(rows(x_pad, 4, M) - rows(x_pad, 2, M),
                     rows(x_pad, 5, M) - rows(x_pad, 1, M),
                     rows(x_pad, 6, M) - rows(x_pad, 0, M))

    grad = jnp.maximum(gx, gy) * INV_GRD_UP

    # Geodesic border of the closing along H: rows outside [0, h_img) count as
    # -BIG for the dilation and +BIG for the erosion.  (1, M, 1) mask, cheap.
    iota_shape = (1,) * (x_pad.ndim - 2) + (M, 1)
    g_row = lax.broadcasted_iota(jnp.int32, iota_shape, x_pad.ndim - 2) + (row0 + 3)
    in_img = jnp.logical_and(g_row >= 0, g_row < h_img)

    # closing = erosion(dilation(grad)) with a flat 3x3 structuring element,
    # separable: 3-tap along H (slices), then 3-tap along W (rolls).
    gd = jnp.where(in_img, grad, -BIG)
    dil_h = jnp.maximum(jnp.maximum(rows(gd, 0, M - 2), rows(gd, 1, M - 2)),
                        rows(gd, 2, M - 2))
    dil = jnp.maximum(jnp.maximum(wshift(dil_h, 1, -BIG), dil_h),
                      wshift(dil_h, -1, -BIG))

    de = jnp.where(rows(in_img, 1, M - 2), dil, BIG)
    ero_h = jnp.minimum(jnp.minimum(rows(de, 0, R), rows(de, 1, R)),
                        rows(de, 2, R))
    ero = jnp.minimum(jnp.minimum(wshift(ero_h, 1, BIG), ero_h),
                      wshift(ero_h, -1, BIG))
    return ero


# ----------------------------------------------------------------------------
# Pallas kernel: one (P planes, TH+2*HALO rows, W_pad) halo'd tile per step.
# ----------------------------------------------------------------------------
def _make_kernel(tile_rows, w_pad, w_img, h_img):
    def kernel(x_ref, o_ref):
        j = pl.program_id(1)                       # H-tile index
        x = x_ref[...]                             # (P, TH + 2*HALO, W_pad)

        # Lane-validity: a single (1, 1, W_pad) iota; each wshift builds its
        # own tiny compare and lets jnp.where broadcast it.
        lane = lax.broadcasted_iota(jnp.int32, (1, 1, w_pad), 2)

        def wshift(a, s, fill):
            # out[c] = a[c + s] where column c + s is inside the REAL image
            # width, else `fill`.  pltpu.roll matches jnp.roll (HW-verified).
            rolled = pltpu.roll(a, shift=(-s) % w_pad, axis=a.ndim - 1)
            valid = (lane < (w_img - s)) if s > 0 else (lane >= -s)
            return jnp.where(valid, rolled, jnp.float32(fill))

        row0 = j * tile_rows - HALO                # image row of local row 0
        o_ref[...] = _gradmap_core(x, wshift, h_img, row0)

    return kernel


# ----------------------------------------------------------------------------
# Generation-aware tiling plan.
# ----------------------------------------------------------------------------
def _tpu_vmem_capacity():
    try:
        info = pltpu.get_tpu_info()
        cap = getattr(info, "vmem_capacity_bytes", None)
        if cap:
            return int(cap)
    except Exception:
        pass
    return 128 << 20            # v5e / v6e physical VMEM


def _plan(n_planes, h, w):
    """Returns (w_pad, tile_rows, n_tiles, planes_per_step, n_pad, vmem_limit)."""
    w_pad = -(-w // 128) * 128
    vmem = _tpu_vmem_capacity()
    # Real VMEM footprint is ~20x the nominal block (2x double-buffered input +
    # 2x output + ~15 block-sized temporaries), so keep the nominal block at
    # ~vmem/48:  v5e/v6e (128 MiB) -> 2 MiB blocks, v7x (64 MiB) -> ~1.3 MiB.
    budget = min(max(vmem // 48, 1 << 20), 2 << 20)
    row_bytes = w_pad * 4

    if (h + 2 * HALO) * row_bytes <= budget:
        tile_rows, n_tiles = h, 1                  # whole plane per step
    else:
        tile_rows = min(budget // row_bytes - 2 * HALO, 512)
        tile_rows = max(8, (tile_rows // 8) * 8)   # output-block sublane align
        n_tiles = -(-h // tile_rows)
        # TODO(synk): also tile W (with a 3-column halo) for ultra-wide planes
        # where even 8 rows of W_pad exceed the budget.

    tile_bytes = (tile_rows + 2 * HALO) * row_bytes
    p = min(max(budget // tile_bytes, 1), n_planes)
    if n_tiles == 1 and n_planes >= 2 and p >= n_planes:
        p = -(-n_planes // 2)          # keep >= 2 grid steps for v7x's two TCs
    n_pad = -(-n_planes // p) * p

    block_bytes = p * tile_bytes
    vmem_limit = max(26 * block_bytes + (16 << 20), 32 << 20)
    vmem_limit = min(vmem_limit, vmem * 3 // 4)
    return w_pad, tile_rows, n_tiles, p, n_pad, int(vmem_limit)


# ----------------------------------------------------------------------------
# Wrapper.
# ----------------------------------------------------------------------------
def gradmap_cuda_forward(img):
    """img: [B, C, H, W] float32 (NCHW).  Returns closing(gradmap), same shape."""
    B, C, H, W = img.shape
    n = B * C
    x = img.reshape(n, H, W).astype(jnp.float32)

    w_pad, tile_rows, n_tiles, p, n_pad, vmem_limit = _plan(n, H, W)
    l_rows = tile_rows + 2 * HALO
    h_out = n_tiles * tile_rows

    # Zero halo rows / lane padding / plane padding laid out in HBM once; the
    # overlapping H tiles are materialized so plain BlockSpec pipelining keeps
    # working (one extra elementwise pass; the kernel itself is VALU-bound).
    # TODO(synk): replace the materialized overlap with a manual halo DMA
    # (memory_space=pl.ANY + make_async_copy) to drop the extra HBM pass.
    x_p = jnp.pad(x, ((0, n_pad - n), (HALO, h_out - H + HALO), (0, w_pad - W)))
    if n_tiles == 1:
        xg = x_p[:, None]                                    # (n_pad,1,L,W_pad)
    else:
        xg = jnp.stack(
            [x_p[:, j * tile_rows:j * tile_rows + l_rows] for j in range(n_tiles)],
            axis=1)                                          # (n_pad,nT,L,W_pad)

    out = pl.pallas_call(
        _make_kernel(tile_rows, w_pad, W, H),
        out_shape=jax.ShapeDtypeStruct((n_pad, h_out, w_pad), jnp.float32),
        grid_spec=pltpu.PrefetchScalarGridSpec(
            num_scalar_prefetch=0,
            grid=(n_pad // p, n_tiles),
            in_specs=[pl.BlockSpec((p, None, l_rows, w_pad),
                                   lambda i, j: (i, j, 0, 0))],
            out_specs=pl.BlockSpec((p, tile_rows, w_pad),
                                   lambda i, j: (i, j, 0)),
        ),
        compiler_params=pltpu.CompilerParams(
            dimension_semantics=("parallel", "parallel"),
            vmem_limit_bytes=vmem_limit),
    )(xg)
    return out[:n, :H, :W].reshape(B, C, H, W)


# ---------------- pure-JAX reference (same shared core, pad/slice W shifts) --
def gradmap_cuda_reference(img):
    B, C, H, W = img.shape
    x = img.reshape(B * C, H, W).astype(jnp.float32)
    x_pad = jnp.pad(x, ((0, 0), (HALO, HALO), (0, 0)))

    def wshift(a, s, fill):
        nw = a.shape[-1]
        if s > 0:
            a2 = jnp.pad(a, ((0, 0), (0, 0), (0, s)), constant_values=fill)
            return a2[..., s:s + nw]
        a2 = jnp.pad(a, ((0, 0), (0, 0), (-s, 0)), constant_values=fill)
        return a2[..., :nw]

    out = _gradmap_core(x_pad, wshift, H, -HALO)
    return out.reshape(B, C, H, W)


if __name__ == "__main__":
    key = jax.random.PRNGKey(0)
    B, C, H, W = 2, 3, 16, 128
    # Scale so a meaningful fraction of gradients lands inside [1/1023, 4/1023].
    img = jax.random.uniform(key, (B, C, H, W), dtype=jnp.float32) * (8.0 / 1023.0)

    out = jax.block_until_ready(gradmap_cuda_forward(img))
    ref = jax.block_until_ready(gradmap_cuda_reference(img))

    assert out.shape == (B, C, H, W) and out.dtype == jnp.float32
    np.testing.assert_allclose(np.asarray(out), np.asarray(ref), atol=1e-5, rtol=1e-5)
    print("KERNEL_OK")
</pallas_src>

<mosaic_0001>
module attributes {stable_mosaic.version = 11 : i64} {
  func.func @kernel(%arg0: i32, %arg1: i32, %arg2: memref<3x1x26x128xf32, #tpu.memory_space<vmem>>, %arg3: memref<3x16x128xf32, #tpu.memory_space<vmem>>) attributes {dimension_semantics = [#tpu.dimension_semantics<parallel>, #tpu.dimension_semantics<parallel>], iteration_bounds = array<i64: 2, 1>, scalar_prefetch = 0 : i64, scratch_operands = 0 : i64, tpu.core_type = #tpu.core_type<tc>, window_params = [{transform_indices = @transform_0, window_bounds = array<i64: 3, 1, 26, 128>}, {transform_indices = @transform_1, window_bounds = array<i64: 3, 16, 128>}]} {
    %c0 = arith.constant 0 : index
    %c0_0 = arith.constant 0 : index
    %c0_1 = arith.constant 0 : index
    %c0_2 = arith.constant 0 : index
    %0 = vector.load %arg2[%c0, %c0_0, %c0_1, %c0_2] : memref<3x1x26x128xf32, #tpu.memory_space<vmem>>, vector<3x1x26x128xf32>
    %1 = vector.shape_cast %0 : vector<3x1x26x128xf32> to vector<3x26x128xf32>
    %2 = tpu.iota {dimensions = array<i32: 2>} : vector<1x1x128xi32>
    %c16_i32 = arith.constant 16 : i32
    %3 = arith.muli %arg1, %c16_i32 : i32
    %c5_i32 = arith.constant 5 : i32
    %4 = arith.subi %3, %c5_i32 : i32
    %5 = vector.extract_strided_slice %1 {offsets = [0, 3, 0], sizes = [3, 20, 128], strides = [1, 1, 1]} : vector<3x26x128xf32> to vector<3x20x128xf32>
    %c127_i32 = arith.constant 127 : i32
    %6 = tpu.dynamic_rotate %5 by %c127_i32 dim 2 : vector<3x20x128xf32>, i32 -> vector<3x20x128xf32>
    %c127_i32_3 = arith.constant 127 : i32
    %7 = vector.broadcast %c127_i32_3 : i32 to vector<1x1x128xi32>
    %8 = arith.cmpi slt, %2, %7 : vector<1x1x128xi32>
    %cst = arith.constant 0.000000e+00 : f32
    %9 = vector.shape_cast %8 : vector<1x1x128xi1> to vector<1x1x128xi1>
    %10 = vector.broadcast %9 : vector<1x1x128xi1> to vector<3x20x128xi1>
    %11 = vector.broadcast %cst : f32 to vector<3x20x128xf32>
    %12 = arith.select %10, %6, %11 : vector<3x20x128xi1>, vector<3x20x128xf32>
    %c1_i32 = arith.constant 1 : i32
    %13 = tpu.dynamic_rotate %5 by %c1_i32 dim 2 : vector<3x20x128xf32>, i32 -> vector<3x20x128xf32>
    %c1_i32_4 = arith.constant 1 : i32
    %14 = vector.broadcast %c1_i32_4 : i32 to vector<1x1x128xi32>
    %15 = arith.cmpi sge, %2, %14 : vector<1x1x128xi32>
    %cst_5 = arith.constant 0.000000e+00 : f32
    %16 = vector.shape_cast %15 : vector<1x1x128xi1> to vector<1x1x128xi1>
    %17 = vector.broadcast %16 : vector<1x1x128xi1> to vector<3x20x128xi1>
    %18 = vector.broadcast %cst_5 : f32 to vector<3x20x128xf32>
    %19 = arith.select %17, %13, %18 : vector<3x20x128xi1>, vector<3x20x128xf32>
    %20 = arith.subf %12, %19 : vector<3x20x128xf32>
    %c126_i32 = arith.constant 126 : i32
    %21 = tpu.dynamic_rotate %5 by %c126_i32 dim 2 : vector<3x20x128xf32>, i32 -> vector<3x20x128xf32>
    %c126_i32_6 = arith.constant 126 : i32
    %22 = vector.broadcast %c126_i32_6 : i32 to vector<1x1x128xi32>
    %23 = arith.cmpi slt, %2, %22 : vector<1x1x128xi32>
    %cst_7 = arith.constant 0.000000e+00 : f32
    %24 = vector.shape_cast %23 : vector<1x1x128xi1> to vector<1x1x128xi1>
    %25 = vector.broadcast %24 : vector<1x1x128xi1> to vector<3x20x128xi1>
    %26 = vector.broadcast %cst_7 : f32 to vector<3x20x128xf32>
    %27 = arith.select %25, %21, %26 : vector<3x20x128xi1>, vector<3x20x128xf32>
    %c2_i32 = arith.constant 2 : i32
    %28 = tpu.dynamic_rotate %5 by %c2_i32 dim 2 : vector<3x20x128xf32>, i32 -> vector<3x20x128xf32>
    %c2_i32_8 = arith.constant 2 : i32
    %29 = vector.broadcast %c2_i32_8 : i32 to vector<1x1x128xi32>
    %30 = arith.cmpi sge, %2, %29 : vector<1x1x128xi32>
    %cst_9 = arith.constant 0.000000e+00 : f32
    %31 = vector.shape_cast %30 : vector<1x1x128xi1> to vector<1x1x128xi1>
    %32 = vector.broadcast %31 : vector<1x1x128xi1> to vector<3x20x128xi1>
    %33 = vector.broadcast %cst_9 : f32 to vector<3x20x128xf32>
    %34 = arith.select %32, %28, %33 : vector<3x20x128xi1>, vector<3x20x128xf32>
    %35 = arith.subf %27, %34 : vector<3x20x128xf32>
    %c125_i32 = arith.constant 125 : i32
    %36 = tpu.dynamic_rotate %5 by %c125_i32 dim 2 : vector<3x20x128xf32>, i32 -> vector<3x20x128xf32>
    %c125_i32_10 = arith.constant 125 : i32
    %37 = vector.broadcast %c125_i32_10 : i32 to vector<1x1x128xi32>
    %38 = arith.cmpi slt, %2, %37 : vector<1x1x128xi32>
    %cst_11 = arith.constant 0.000000e+00 : f32
    %39 = vector.shape_cast %38 : vector<1x1x128xi1> to vector<1x1x128xi1>
    %40 = vector.broadcast %39 : vector<1x1x128xi1> to vector<3x20x128xi1>
    %41 = vector.broadcast %cst_11 : f32 to vector<3x20x128xf32>
    %42 = arith.select %40, %36, %41 : vector<3x20x128xi1>, vector<3x20x128xf32>
    %c3_i32 = arith.constant 3 : i32
    %43 = tpu.dynamic_rotate %5 by %c3_i32 dim 2 : vector<3x20x128xf32>, i32 -> vector<3x20x128xf32>
    %c3_i32_12 = arith.constant 3 : i32
    %44 = vector.broadcast %c3_i32_12 : i32 to vector<1x1x128xi32>
    %45 = arith.cmpi sge, %2, %44 : vector<1x1x128xi32>
    %cst_13 = arith.constant 0.000000e+00 : f32
    %46 = vector.shape_cast %45 : vector<1x1x128xi1> to vector<1x1x128xi1>
    %47 = vector.broadcast %46 : vector<1x1x128xi1> to vector<3x20x128xi1>
    %48 = vector.broadcast %cst_13 : f32 to vector<3x20x128xf32>
    %49 = arith.select %47, %43, %48 : vector<3x20x128xi1>, vector<3x20x128xf32>
    %50 = arith.subf %42, %49 : vector<3x20x128xf32>
    %51 = arith.addf %20, %35 : vector<3x20x128xf32>
    %52 = arith.addf %51, %50 : vector<3x20x128xf32>
    %cst_14 = arith.constant 0.333333343 : f32
    %53 = vector.broadcast %cst_14 : f32 to vector<3x20x128xf32>
    %54 = arith.mulf %52, %53 : vector<3x20x128xf32>
    %55 = math.absf %20 : vector<3x20x128xf32>
    %56 = arith.subf %20, %54 : vector<3x20x128xf32>
    %57 = math.absf %56 : vector<3x20x128xf32>
    %cst_15 = arith.constant 4.88758553E-4 : f32
    %58 = vector.broadcast %cst_15 : f32 to vector<3x20x128xf32>
    %59 = arith.cmpf ogt, %57, %58 : vector<3x20x128xf32>
    %cst_16 = arith.constant 9.77517105E-4 : f32
    %60 = vector.broadcast %cst_16 : f32 to vector<3x20x128xf32>
    %61 = arith.cmpf olt, %55, %60 : vector<3x20x128xf32>
    %62 = arith.ori %59, %61 : vector<3x20x128xi1>
    %cst_17 = arith.constant 0.00391006842 : f32
    %63 = vector.broadcast %cst_17 : f32 to vector<3x20x128xf32>
    %64 = arith.cmpf ogt, %55, %63 : vector<3x20x128xf32>
    %65 = arith.ori %62, %64 : vector<3x20x128xi1>
    %cst_18 = arith.constant 0.000000e+00 : f32
    %66 = vector.broadcast %cst_18 : f32 to vector<3x20x128xf32>
    %67 = arith.select %65, %66, %55 : vector<3x20x128xi1>, vector<3x20x128xf32>
    %68 = vector.extract_strided_slice %1 {offsets = [0, 4, 0], sizes = [3, 20, 128], strides = [1, 1, 1]} : vector<3x26x128xf32> to vector<3x20x128xf32>
    %69 = vector.extract_strided_slice %1 {offsets = [0, 2, 0], sizes = [3, 20, 128], strides = [1, 1, 1]} : vector<3x26x128xf32> to vector<3x20x128xf32>
    %70 = arith.subf %68, %69 : vector<3x20x128xf32>
    %71 = vector.extract_strided_slice %1 {offsets = [0, 5, 0], sizes = [3, 20, 128], strides = [1, 1, 1]} : vector<3x26x128xf32> to vector<3x20x128xf32>
    %72 = vector.extract_strided_slice %1 {offsets = [0, 1, 0], sizes = [3, 20, 128], strides = [1, 1, 1]} : vector<3x26x128xf32> to vector<3x20x128xf32>
    %73 = arith.subf %71, %72 : vector<3x20x128xf32>
    %74 = vector.extract_strided_slice %1 {offsets = [0, 6, 0], sizes = [3, 20, 128], strides = [1, 1, 1]} : vector<3x26x128xf32> to vector<3x20x128xf32>
    %75 = vector.extract_strided_slice %1 {offsets = [0, 0, 0], sizes = [3, 20, 128], strides = [1, 1, 1]} : vector<3x26x128xf32> to vector<3x20x128xf32>
    %76 = arith.subf %74, %75 : vector<3x20x128xf32>
    %77 = arith.addf %70, %73 : vector<3x20x128xf32>
    %78 = arith.addf %77, %76 : vector<3x20x128xf32>
    %cst_19 = arith.constant 0.333333343 : f32
    %79 = vector.broadcast %cst_19 : f32 to vector<3x20x128xf32>
    %80 = arith.mulf %78, %79 : vector<3x20x128xf32>
    %81 = math.absf %70 : vector<3x20x128xf32>
    %82 = arith.subf %70, %80 : vector<3x20x128xf32>
    %83 = math.absf %82 : vector<3x20x128xf32>
    %cst_20 = arith.constant 4.88758553E-4 : f32
    %84 = vector.broadcast %cst_20 : f32 to vector<3x20x128xf32>
    %85 = arith.cmpf ogt, %83, %84 : vector<3x20x128xf32>
    %cst_21 = arith.constant 9.77517105E-4 : f32
    %86 = vector.broadcast %cst_21 : f32 to vector<3x20x128xf32>
    %87 = arith.cmpf olt, %81, %86 : vector<3x20x128xf32>
    %88 = arith.ori %85, %87 : vector<3x20x128xi1>
    %cst_22 = arith.constant 0.00391006842 : f32
    %89 = vector.broadcast %cst_22 : f32 to vector<3x20x128xf32>
    %90 = arith.cmpf ogt, %81, %89 : vector<3x20x128xf32>
    %91 = arith.ori %88, %90 : vector<3x20x128xi1>
    %cst_23 = arith.constant 0.000000e+00 : f32
    %92 = vector.broadcast %cst_23 : f32 to vector<3x20x128xf32>
    %93 = arith.select %91, %92, %81 : vector<3x20x128xi1>, vector<3x20x128xf32>
    %94 = arith.maximumf %67, %93 : vector<3x20x128xf32>
    %cst_24 = arith.constant 2.557500e+02 : f32
    %95 = vector.broadcast %cst_24 : f32 to vector<3x20x128xf32>
    %96 = arith.mulf %94, %95 : vector<3x20x128xf32>
    %97 = tpu.iota {dimensions = array<i32: 1>} : vector<1x20x1xi32>
    %c3_i32_25 = arith.constant 3 : i32
    %98 = arith.addi %4, %c3_i32_25 : i32
    %99 = vector.broadcast %98 : i32 to vector<1x20x1xi32>
    %100 = arith.addi %97, %99 : vector<1x20x1xi32>
    %c0_i32 = arith.constant 0 : i32
    %101 = vector.broadcast %c0_i32 : i32 to vector<1x20x1xi32>
    %102 = arith.cmpi sge, %100, %101 : vector<1x20x1xi32>
    %c16_i32_26 = arith.constant 16 : i32
    %103 = vector.broadcast %c16_i32_26 : i32 to vector<1x20x1xi32>
    %104 = arith.cmpi slt, %100, %103 : vector<1x20x1xi32>
    %105 = arith.andi %102, %104 : vector<1x20x1xi1>
    %cst_27 = arith.constant -1.000000e+04 : f32
    %106 = vector.shape_cast %105 : vector<1x20x1xi1> to vector<1x20x1xi1>
    %107 = vector.broadcast %106 : vector<1x20x1xi1> to vector<3x20x128xi1>
    %108 = vector.broadcast %cst_27 : f32 to vector<3x20x128xf32>
    %109 = arith.select %107, %96, %108 : vector<3x20x128xi1>, vector<3x20x128xf32>
    %110 = vector.extract_strided_slice %109 {offsets = [0, 0, 0], sizes = [3, 18, 128], strides = [1, 1, 1]} : vector<3x20x128xf32> to vector<3x18x128xf32>
    %111 = vector.extract_strided_slice %109 {offsets = [0, 1, 0], sizes = [3, 18, 128], strides = [1, 1, 1]} : vector<3x20x128xf32> to vector<3x18x128xf32>
    %112 = arith.maximumf %110, %111 : vector<3x18x128xf32>
    %113 = vector.extract_strided_slice %109 {offsets = [0, 2, 0], sizes = [3, 18, 128], strides = [1, 1, 1]} : vector<3x20x128xf32> to vector<3x18x128xf32>
    %114 = arith.maximumf %112, %113 : vector<3x18x128xf32>
    %c127_i32_28 = arith.constant 127 : i32
    %115 = tpu.dynamic_rotate %114 by %c127_i32_28 dim 2 : vector<3x18x128xf32>, i32 -> vector<3x18x128xf32>
    %c127_i32_29 = arith.constant 127 : i32
    %116 = vector.broadcast %c127_i32_29 : i32 to vector<1x1x128xi32>
    %117 = arith.cmpi slt, %2, %116 : vector<1x1x128xi32>
    %cst_30 = arith.constant -1.000000e+04 : f32
    %118 = vector.shape_cast %117 : vector<1x1x128xi1> to vector<1x1x128xi1>
    %119 = vector.broadcast %118 : vector<1x1x128xi1> to vector<3x18x128xi1>
    %120 = vector.broadcast %cst_30 : f32 to vector<3x18x128xf32>
    %121 = arith.select %119, %115, %120 : vector<3x18x128xi1>, vector<3x18x128xf32>
    %122 = arith.maximumf %121, %114 : vector<3x18x128xf32>
    %c1_i32_31 = arith.constant 1 : i32
    %123 = tpu.dynamic_rotate %114 by %c1_i32_31 dim 2 : vector<3x18x128xf32>, i32 -> vector<3x18x128xf32>
    %c1_i32_32 = arith.constant 1 : i32
    %124 = vector.broadcast %c1_i32_32 : i32 to vector<1x1x128xi32>
    %125 = arith.cmpi sge, %2, %124 : vector<1x1x128xi32>
    %cst_33 = arith.constant -1.000000e+04 : f32
    %126 = vector.shape_cast %125 : vector<1x1x128xi1> to vector<1x1x128xi1>
    %127 = vector.broadcast %126 : vector<1x1x128xi1> to vector<3x18x128xi1>
    %128 = vector.broadcast %cst_33 : f32 to vector<3x18x128xf32>
    %129 = arith.select %127, %123, %128 : vector<3x18x128xi1>, vector<3x18x128xf32>
    %130 = arith.maximumf %122, %129 : vector<3x18x128xf32>
    %131 = vector.extract_strided_slice %105 {offsets = [0, 1, 0], sizes = [1, 18, 1], strides = [1, 1, 1]} : vector<1x20x1xi1> to vector<1x18x1xi1>
    %cst_34 = arith.constant 1.000000e+04 : f32
    %132 = vector.shape_cast %131 : vector<1x18x1xi1> to vector<1x18x1xi1>
    %133 = vector.broadcast %132 : vector<1x18x1xi1> to vector<3x18x128xi1>
    %134 = vector.broadcast %cst_34 : f32 to vector<3x18x128xf32>
    %135 = arith.select %133, %130, %134 : vector<3x18x128xi1>, vector<3x18x128xf32>
    %136 = vector.extract_strided_slice %135 {offsets = [0, 0, 0], sizes = [3, 16, 128], strides = [1, 1, 1]} : vector<3x18x128xf32> to vector<3x16x128xf32>
    %137 = vector.extract_strided_slice %135 {offsets = [0, 1, 0], sizes = [3, 16, 128], strides = [1, 1, 1]} : vector<3x18x128xf32> to vector<3x16x128xf32>
    %138 = arith.minimumf %136, %137 : vector<3x16x128xf32>
    %139 = vector.extract_strided_slice %135 {offsets = [0, 2, 0], sizes = [3, 16, 128], strides = [1, 1, 1]} : vector<3x18x128xf32> to vector<3x16x128xf32>
    %140 = arith.minimumf %138, %139 : vector<3x16x128xf32>
    %c127_i32_35 = arith.constant 127 : i32
    %141 = tpu.dynamic_rotate %140 by %c127_i32_35 dim 2 : vector<3x16x128xf32>, i32 -> vector<3x16x128xf32>
    %c127_i32_36 = arith.constant 127 : i32
    %142 = vector.broadcast %c127_i32_36 : i32 to vector<1x1x128xi32>
    %143 = arith.cmpi slt, %2, %142 : vector<1x1x128xi32>
    %cst_37 = arith.constant 1.000000e+04 : f32
    %144 = vector.shape_cast %143 : vector<1x1x128xi1> to vector<1x1x128xi1>
    %145 = vector.broadcast %144 : vector<1x1x128xi1> to vector<3x16x128xi1>
    %146 = vector.broadcast %cst_37 : f32 to vector<3x16x128xf32>
    %147 = arith.select %145, %141, %146 : vector<3x16x128xi1>, vector<3x16x128xf32>
    %148 = arith.minimumf %147, %140 : vector<3x16x128xf32>
    %c1_i32_38 = arith.constant 1 : i32
    %149 = tpu.dynamic_rotate %140 by %c1_i32_38 dim 2 : vector<3x16x128xf32>, i32 -> vector<3x16x128xf32>
    %c1_i32_39 = arith.constant 1 : i32
    %150 = vector.broadcast %c1_i32_39 : i32 to vector<1x1x128xi32>
    %151 = arith.cmpi sge, %2, %150 : vector<1x1x128xi32>
    %cst_40 = arith.constant 1.000000e+04 : f32
    %152 = vector.shape_cast %151 : vector<1x1x128xi1> to vector<1x1x128xi1>
    %153 = vector.broadcast %152 : vector<1x1x128xi1> to vector<3x16x128xi1>
    %154 = vector.broadcast %cst_40 : f32 to vector<3x16x128xf32>
    %155 = arith.select %153, %149, %154 : vector<3x16x128xi1>, vector<3x16x128xf32>
    %156 = arith.minimumf %148, %155 : vector<3x16x128xf32>
    %c0_41 = arith.constant 0 : index
    %c0_42 = arith.constant 0 : index
    %c0_43 = arith.constant 0 : index
    %157 = vector.load %arg3[%c0_41, %c0_42, %c0_43] : memref<3x16x128xf32, #tpu.memory_space<vmem>>, vector<3x16x128xf32>
    tpu.vector_store %arg3[%c0_41, %c0_42, %c0_43], %156 {strides = array<i32>} : memref<3x16x128xf32, #tpu.memory_space<vmem>>, vector<3x16x128xf32>,
    return
  }
  func.func @transform_0(%arg0: i32, %arg1: i32) -> (i32, i32, i32, i32) {
    %c0_i32 = arith.constant 0 : i32
    %c0_i32_0 = arith.constant 0 : i32
    %c0_i32_1 = arith.constant 0 : i32
    return %arg0, %arg1, %c0_i32, %c0_i32_0 : i32, i32, i32, i32
  }
  func.func @transform_1(%arg0: i32, %arg1: i32) -> (i32, i32, i32) {
    %c0_i32 = arith.constant 0 : i32
    %c0_i32_0 = arith.constant 0 : i32
    return %arg0, %arg1, %c0_i32 : i32, i32, i32
  }
}

</mosaic_0001>

<llo_original>
// kernel: tpu_custom_call.1
$region0: #{tpu_custom_call.1}
  #allocation0 [shape = 'u32[]', space=smem, size = 0x4, offset = 0x4, fixed_abs, tag = 'smem constant byte address 0x4 - core index']
  #allocation1 [shape = 'u32[144,128]{1,0:T(1,128)}', space=vmem, size = 0x12000, scoped, tag = 'internal scratch']
  %s0 = inlined_call_operand.vmem [shape: f32[6,1,26,128], index: 0, kind: input, shape index: {}]
  %s1 = inlined_call_operand.hbm [shape: f32[6,16,128], index: 1, kind: output, shape index: {}]
  %s2 = sld [smem:[#allocation0]]
  $region37: #{tpu_custom_call.1} parent=0
    _
  %s4 = ssub.s32 1, %s2
  %s5 = scalar_select 0, %s4, %s2
  $region1: #{tpu_custom_call.1} parent=0
    #allocation2 [shape = 'u8[49152]{0}', space=vmem, size = 0xc000, scoped, tag = 'output window, operand 0']
    #allocation3 [shape = 's32[2]{0}', space=sflag, size = 0x8, scoped, tag = 'scoped memory for tpu_custom_call.1']
    %6 = vsyncpa [#allocation3], 0
    %s7 = scalar_lea.sflag [#allocation3], 1
    %8 = vsyncpa %s7, 0
    loop: start=0, step=1, limit=4
    $region2: #{tpu_custom_call.1} parent=1 // loop_pre_header
      _
    $region3: #{tpu_custom_call.1} parent=1 // loop_header
      %s10 = sphi 0, %s14
      %p11 = scmp.ge.s32.totalorder %s10, 4
      %s17 = sphi 0, %s29
      %s18 = sphi 0, %s25
      %s19 = sphi 0, %s17
      %s20 = sphi 0, %s18
      %s21 = sphi 0, %s19
      %s22 = sphi 0, %s20
      %s34 = sphi 0, %s36
      %s37 = sphi 0, %s34
      %s38 = sphi 0, %s37
      %s54 = sphi 0, %s38
      %s62 = sphi 0, %s64
      %s65 = sphi 0, %s62
      %s66 = sphi 0, %s65
      %s82 = sphi 0, %s66
    $region4: #{tpu_custom_call.1} parent=1 // loop_header_branch
      %13 = sbr.rel (%p11) target = $region8
    $region5: #{tpu_custom_call.1} parent=1 // loop_body
      %s15 = ssub.s32 %s10, 1
      %s16 = ssub.s32 %s10, 2
      %s23 = sadd.s32 1, %s18
      %p24 = scmp.ge.s32.totalorder %s23, 1
      %s25 = scalar_select %p24, 0, %s23
      %s26 = sadd.s32 1, %s17
      %s27 = scalar_select %p24, %s26, %s17
      %p28 = scmp.ge.s32.totalorder %s27, 2
      %s29 = scalar_select %p28, 0, %s27
      %s30 = ssub.s32 %s17, %s29
      %s31 = ssub.s32 %s18, %s25
      %s32 = sor.u32 %s30, %s31
      %p33 = scmp.eq.s32.totalorder %s32, 0
      %s35 = sadd.s32 %s34, 1
      %s36 = scalar_select %p33, %s34, %s35
      %p39 = pneg %p33
      %p40 = scmp.eq.s32.totalorder %s10, 1
      %p41 = por %p39, %p40
      %p42 = scmp.ne.s32.totalorder %s34, %s37
      %p43 = scmp.eq.s32.totalorder %s10, 0
      %p44 = por %p42, %p43
      %p45 = scmp.ne.s32.totalorder %s34, %s37
      %p46 = scmp.eq.s32.totalorder %s15, 1
      %p47 = por %p45, %p46
      %p48 = scmp.ne.s32.totalorder %s37, %s38
      %p49 = scmp.eq.s32.totalorder %s15, 0
      %p50 = por %p48, %p49
      %p51 = scmp.ne.s32.totalorder %s37, %s38
      %p52 = scmp.eq.s32.totalorder %s16, 1
      %p53 = por %p51, %p52
      %p55 = scmp.ne.s32.totalorder %s38, %s54
      %p56 = scmp.eq.s32.totalorder %s16, 0
      %p57 = por %p55, %p56
      %s58 = ssub.s32 %s17, %s29
      %s59 = ssub.s32 %s18, %s25
      %s60 = sor.u32 %s58, %s59
      %p61 = scmp.eq.s32.totalorder %s60, 0
      %s63 = sadd.s32 %s62, 1
      %s64 = scalar_select %p61, %s62, %s63
      %p67 = pneg %p61
      %p68 = scmp.eq.s32.totalorder %s10, 1
      %p69 = por %p67, %p68
      %p70 = scmp.ne.s32.totalorder %s62, %s65
      %p71 = scmp.eq.s32.totalorder %s10, 0
      %p72 = por %p70, %p71
      %p73 = scmp.ne.s32.totalorder %s62, %s65
      %p74 = scmp.eq.s32.totalorder %s15, 1
      %p75 = por %p73, %p74
      %p76 = scmp.ne.s32.totalorder %s65, %s66
      %p77 = scmp.eq.s32.totalorder %s15, 0
      %p78 = por %p76, %p77
      %p79 = scmp.ne.s32.totalorder %s65, %s66
      %p80 = scmp.eq.s32.totalorder %s16, 1
      %p81 = por %p79, %p80
      %p83 = scmp.ne.s32.totalorder %s66, %s82
      %p84 = scmp.eq.s32.totalorder %s16, 0
      %p85 = por %p83, %p84
      %p86 = scmp.le.s32.totalorder 1, %s10
      %p87 = scmp.lt.s32.totalorder %s10, 3
      %p88 = pnand %p86, %p87
      %p89 = pneg %p88
      // Predicated region
      $region9: #{tpu_custom_call.1} parent=5 // pred_check
        _
      $region10: #{tpu_custom_call.1} parent=5 // pred_check_branch
        %91 = sbr.rel (%p88) target = $region12
      $region11: #{tpu_custom_call.1} parent=5 // pred_region
        %s92 = ssub.s32 %s10, 1
      $region12: #{tpu_custom_call.1} parent=5 // pred_fallthru
        _
      %p93 = scmp.lt.s32.totalorder %s10, 2
      // Predicated region
      $region13: #{tpu_custom_call.1} parent=5 // pred_check
        %p94 = pneg %p93
      $region14: #{tpu_custom_call.1} parent=5 // pred_check_branch
        %96 = sbr.rel (%p94) target = $region16
      $region15: #{tpu_custom_call.1} parent=5 // pred_region
        // Predicated region
        $region17: #{tpu_custom_call.1} parent=15 // pred_check
          %p97 = pneg %p44
        $region18: #{tpu_custom_call.1} parent=15 // pred_check_branch
          %99 = sbr.rel (%p97) target = $region20
        $region19: #{tpu_custom_call.1} parent=15 // pred_region
          %s100 = smul.u32 3, %s17
          %p101 = scmp.lt.s32.totalorder %s100, 5
          %s102 = scalar_select %p101, %s100, 5
          %p103 = scmp.lt.s32.totalorder %s18, 0
          %s104 = scalar_select %p103, %s18, 0
          %s105 = smul.addr %s104, 4
          %s106 = smul.addr %s102, 4
          %s107 = sadd.s32 %s105, %s106
          %s108 = smul.addr %s107, 8
          %s109 = scalar_lea.vmem %s0, %s108
          %s110 = smul.u32 3, %s17
        $region20: #{tpu_custom_call.1} parent=15 // pred_fallthru
          _
      $region16: #{tpu_custom_call.1} parent=5 // pred_fallthru
        _
      %p111 = scmp.le.s32.totalorder 1, %s10
      %p112 = scmp.lt.s32.totalorder %s10, 3
      %p113 = pnand %p111, %p112
      %p114 = pneg %p113
      // Predicated region
      $region21: #{tpu_custom_call.1} parent=5 // pred_check
        _
      $region22: #{tpu_custom_call.1} parent=5 // pred_check_branch
        %116 = sbr.rel (%p113) target = $region24
      $region23: #{tpu_custom_call.1} parent=5 // pred_region
        %s117 = ssub.s32 %s10, 1
        %s118 = smul.u32 3, %s19
        %p119 = scmp.lt.s32.totalorder %s118, 5
        %s120 = scalar_select %p119, %s118, 5
        %p121 = scmp.lt.s32.totalorder %s20, 0
        %s122 = scalar_select %p121, %s20, 0
        %s123 = smul.addr %s122, 4
        %s124 = smul.addr %s120, 4
        %s125 = sadd.s32 %s123, %s124
        %s126 = smul.addr %s125, 8
        %s127 = scalar_lea.vmem %s0, %s126
        %p128 = pneg %p50
        %p129 = pneg %p47
        %p130 = pneg %p78
        %p131 = pneg %p75
        %s132 = sand.u32 %s65, 1
        %s133 = scalar_lea.sflag [#allocation3], %s132
        %s134 = sand.u32 %s65, 1
        %s135 = smul.addr %s134, 48
        %s136 = scalar_lea.vmem [#allocation2], %s135
        %s137 = smul.u32 3, %s19
        %p138 = scmp.lt.s32.totalorder %s137, 5
        %s139 = scalar_select %p138, %s137, 5
        %p140 = scmp.lt.s32.totalorder %s20, 0
        %s141 = scalar_select %p140, %s20, 0
        %s142 = smul.addr %s141, 4
        %s143 = smul.addr %s139, 4
        %s144 = sadd.s32 %s142, %s143
        %s145 = smul.addr %s144, 8
        %s146 = scalar_lea.vmem %s0, %s145
        %s147 = smul.u32 3, %s19
        %s148 = smul.u32 3, %s19
        %s149 = smul.u32 2, %s20
        %v150 = vld [vmem:[%s146] sm:$0xff]
        %v151 = vld [vmem:[%s146 + $0x8] sm:$0xff]
        %v152 = vld [vmem:[%s146 + $0x10] sm:$0xff]
        %v153 = vld [vmem:[%s146 + $0x18] sm:$0x3]
        %v154 = vld [vmem:[%s146 + $0x20] sm:$0xff]
        %v155 = vld [vmem:[%s146 + $0x28] sm:$0xff]
        %v156 = vld [vmem:[%s146 + $0x30] sm:$0xff]
        %v157 = vld [vmem:[%s146 + $0x38] sm:$0x3]
        %v158 = vld [vmem:[%s146 + $0x40] sm:$0xff]
        %v159 = vld [vmem:[%s146 + $0x48] sm:$0xff]
        %v160 = vld [vmem:[%s146 + $0x50] sm:$0xff]
        %v161 = vld [vmem:[%s146 + $0x58] sm:$0x3]
        %v162 = vlaneseq
        %v163 = vand.u32 %v162, 127
        %s164 = smul.u32 %s20, 16
        %vm174 = vcmask 1044480
        %v175 = vrot.slane %v150, 3
        %v176 = vrot.slane %v151, 3
        %v177 = vsel %vm174, %v175, %v176
        %v178 = vrot.slane %v152, 3
        %v179 = vsel %vm174, %v176, %v178
        %v180 = vrot.slane %v154, 3
        %v181 = vrot.slane %v155, 3
        %v182 = vsel %vm174, %v180, %v181
        %v183 = vrot.slane %v156, 3
        %v184 = vsel %vm174, %v181, %v183
        %v185 = vrot.slane %v158, 3
        %v186 = vrot.slane %v159, 3
        %v187 = vsel %vm174, %v185, %v186
        %v188 = vrot.slane %v160, 3
        %v189 = vsel %vm174, %v186, %v188
        %199 = vrot.lane.b32.xlu0 %v177, 127
        %v200 = vpop.permute.xlu0 %199
        %201 = vrot.lane.b32.xlu0 %v179, 127
        %v202 = vpop.permute.xlu0 %201
        %203 = vrot.lane.b32.xlu0 %v178, 127
        %v204 = vpop.permute.xlu0 %203
        %205 = vrot.lane.b32.xlu0 %v182, 127
        %v206 = vpop.permute.xlu0 %205
        %207 = vrot.lane.b32.xlu0 %v184, 127
        %v208 = vpop.permute.xlu0 %207
        %209 = vrot.lane.b32.xlu0 %v183, 127
        %v210 = vpop.permute.xlu0 %209
        %211 = vrot.lane.b32.xlu0 %v187, 127
        %v212 = vpop.permute.xlu0 %211
        %213 = vrot.lane.b32.xlu0 %v189, 127
        %v214 = vpop.permute.xlu0 %213
        %215 = vrot.lane.b32.xlu0 %v188, 127
        %v216 = vpop.permute.xlu0 %215
        %vm217 = vcmp.lt.s32.totalorder %v163, 127
        %v218 = vsel %vm217, 1, 0
        %vm219 = vcmp.eq.s32.totalorder %v218, 1
        %v220 = vsel %vm219, %v200, 0.0
        %v221 = vsel %vm219, %v202, 0.0
        %v222 = vsel %vm219, %v204, 0.0
        %v223 = vsel %vm219, %v206, 0.0
        %v224 = vsel %vm219, %v208, 0.0
        %v225 = vsel %vm219, %v210, 0.0
        %v226 = vsel %vm219, %v212, 0.0
        %v227 = vsel %vm219, %v214, 0.0
        %v228 = vsel %vm219, %v216, 0.0
        %229 = vrot.lane.b32.xlu0 %v177, 1
        %v230 = vpop.permute.xlu0 %229
        %231 = vrot.lane.b32.xlu0 %v179, 1
        %v232 = vpop.permute.xlu0 %231
        %233 = vrot.lane.b32.xlu0 %v178, 1
        %v234 = vpop.permute.xlu0 %233
        %235 = vrot.lane.b32.xlu0 %v182, 1
        %v236 = vpop.permute.xlu0 %235
        %237 = vrot.lane.b32.xlu0 %v184, 1
        %v238 = vpop.permute.xlu0 %237
        %239 = vrot.lane.b32.xlu0 %v183, 1
        %v240 = vpop.permute.xlu0 %239
        %241 = vrot.lane.b32.xlu0 %v187, 1
        %v242 = vpop.permute.xlu0 %241
        %243 = vrot.lane.b32.xlu0 %v189, 1
        %v244 = vpop.permute.xlu0 %243
        %245 = vrot.lane.b32.xlu0 %v188, 1
        %v246 = vpop.permute.xlu0 %245
        %vm247 = vcmp.ge.s32.totalorder %v163, 1
        %v248 = vsel %vm247, 1, 0
        %vm249 = vcmp.eq.s32.totalorder %v248, 1
        %v250 = vsel %vm249, %v230, 0.0
        %v251 = vsel %vm249, %v232, 0.0
        %v252 = vsel %vm249, %v234, 0.0
        %v253 = vsel %vm249, %v236, 0.0
        %v254 = vsel %vm249, %v238, 0.0
        %v255 = vsel %vm249, %v240, 0.0
        %v256 = vsel %vm249, %v242, 0.0
        %v257 = vsel %vm249, %v244, 0.0
        %v258 = vsel %vm249, %v246, 0.0
        %v259 = vsub.f32 %v220, %v250
        %v260 = vsub.f32 %v221, %v251
        %v261 = vsub.f32 %v222, %v252
        %v262 = vsub.f32 %v223, %v253
        %v263 = vsub.f32 %v224, %v254
        %v264 = vsub.f32 %v225, %v255
        %v265 = vsub.f32 %v226, %v256
        %v266 = vsub.f32 %v227, %v257
        %v267 = vsub.f32 %v228, %v258
        %268 = vrot.lane.b32.xlu0 %v177, 126
        %v269 = vpop.permute.xlu0 %268
        %270 = vrot.lane.b32.xlu0 %v179, 126
        %v271 = vpop.permute.xlu0 %270
        %272 = vrot.lane.b32.xlu0 %v178, 126
        %v273 = vpop.permute.xlu0 %272
        %274 = vrot.lane.b32.xlu0 %v182, 126
        %v275 = vpop.permute.xlu0 %274
        %276 = vrot.lane.b32.xlu0 %v184, 126
        %v277 = vpop.permute.xlu0 %276
        %278 = vrot.lane.b32.xlu0 %v183, 126
        %v279 = vpop.permute.xlu0 %278
        %280 = vrot.lane.b32.xlu0 %v187, 126
        %v281 = vpop.permute.xlu0 %280
        %282 = vrot.lane.b32.xlu0 %v189, 126
        %v283 = vpop.permute.xlu0 %282
        %284 = vrot.lane.b32.xlu0 %v188, 126
        %v285 = vpop.permute.xlu0 %284
        %vm286 = vcmp.lt.s32.totalorder %v163, 126
        %v287 = vsel %vm286, 1, 0
        %vm288 = vcmp.eq.s32.totalorder %v287, 1
        %v289 = vsel %vm288, %v269, 0.0
        %v290 = vsel %vm288, %v271, 0.0
        %v291 = vsel %vm288, %v273, 0.0
        %v292 = vsel %vm288, %v275, 0.0
        %v293 = vsel %vm288, %v277, 0.0
        %v294 = vsel %vm288, %v279, 0.0
        %v295 = vsel %vm288, %v281, 0.0
        %v296 = vsel %vm288, %v283, 0.0
        %v297 = vsel %vm288, %v285, 0.0
        %298 = vrot.lane.b32.xlu0 %v177, 2
        %v299 = vpop.permute.xlu0 %298
        %300 = vrot.lane.b32.xlu0 %v179, 2
        %v301 = vpop.permute.xlu0 %300
        %302 = vrot.lane.b32.xlu0 %v178, 2
        %v303 = vpop.permute.xlu0 %302
        %304 = vrot.lane.b32.xlu0 %v182, 2
        %v305 = vpop.permute.xlu0 %304
        %306 = vrot.lane.b32.xlu0 %v184, 2
        %v307 = vpop.permute.xlu0 %306
        %308 = vrot.lane.b32.xlu0 %v183, 2
        %v309 = vpop.permute.xlu0 %308
        %310 = vrot.lane.b32.xlu0 %v187, 2
        %v311 = vpop.permute.xlu0 %310
        %312 = vrot.lane.b32.xlu0 %v189, 2
        %v313 = vpop.permute.xlu0 %312
        %314 = vrot.lane.b32.xlu0 %v188, 2
        %v315 = vpop.permute.xlu0 %314
        %vm316 = vcmp.ge.s32.totalorder %v163, 2
        %v317 = vsel %vm316, 1, 0
        %vm318 = vcmp.eq.s32.totalorder %v317, 1
        %v319 = vsel %vm318, %v299, 0.0
        %v320 = vsel %vm318, %v301, 0.0
        %v321 = vsel %vm318, %v303, 0.0
        %v322 = vsel %vm318, %v305, 0.0
        %v323 = vsel %vm318, %v307, 0.0
        %v324 = vsel %vm318, %v309, 0.0
        %v325 = vsel %vm318, %v311, 0.0
        %v326 = vsel %vm318, %v313, 0.0
        %v327 = vsel %vm318, %v315, 0.0
        %v328 = vsub.f32 %v289, %v319
        %v329 = vsub.f32 %v290, %v320
        %v330 = vsub.f32 %v291, %v321
        %v331 = vsub.f32 %v292, %v322
        %v332 = vsub.f32 %v293, %v323
        %v333 = vsub.f32 %v294, %v324
        %v334 = vsub.f32 %v295, %v325
        %v335 = vsub.f32 %v296, %v326
        %v336 = vsub.f32 %v297, %v327
        %337 = vrot.lane.b32.xlu0 %v177, 125
        %v338 = vpop.permute.xlu0 %337
        %339 = vrot.lane.b32.xlu0 %v179, 125
        %v340 = vpop.permute.xlu0 %339
        %341 = vrot.lane.b32.xlu0 %v178, 125
        %v342 = vpop.permute.xlu0 %341
        %343 = vrot.lane.b32.xlu0 %v182, 125
        %v344 = vpop.permute.xlu0 %343
        %345 = vrot.lane.b32.xlu0 %v184, 125
        %v346 = vpop.permute.xlu0 %345
        %347 = vrot.lane.b32.xlu0 %v183, 125
        %v348 = vpop.permute.xlu0 %347
        %349 = vrot.lane.b32.xlu0 %v187, 125
        %v350 = vpop.permute.xlu0 %349
        %351 = vrot.lane.b32.xlu0 %v189, 125
        %v352 = vpop.permute.xlu0 %351
        %353 = vrot.lane.b32.xlu0 %v188, 125
        %v354 = vpop.permute.xlu0 %353
        %vm355 = vcmp.lt.s32.totalorder %v163, 125
        %v356 = vsel %vm355, 1, 0
        %vm357 = vcmp.eq.s32.totalorder %v356, 1
        %v358 = vsel %vm357, %v338, 0.0
        %v359 = vsel %vm357, %v340, 0.0
        %v360 = vsel %vm357, %v342, 0.0
        %v361 = vsel %vm357, %v344, 0.0
        %v362 = vsel %vm357, %v346, 0.0
        %v363 = vsel %vm357, %v348, 0.0
        %v364 = vsel %vm357, %v350, 0.0
        %v365 = vsel %vm357, %v352, 0.0
        %v366 = vsel %vm357, %v354, 0.0
        %367 = vrot.lane.b32.xlu0 %v177, 3
        %v368 = vpop.permute.xlu0 %367
        %369 = vrot.lane.b32.xlu0 %v179, 3
        %v370 = vpop.permute.xlu0 %369
        %371 = vrot.lane.b32.xlu0 %v178, 3
        %v372 = vpop.permute.xlu0 %371
        %373 = vrot.lane.b32.xlu0 %v182, 3
        %v374 = vpop.permute.xlu0 %373
        %375 = vrot.lane.b32.xlu0 %v184, 3
        %v376 = vpop.permute.xlu0 %375
        %377 = vrot.lane.b32.xlu0 %v183, 3
        %v378 = vpop.permute.xlu0 %377
        %379 = vrot.lane.b32.xlu0 %v187, 3
        %v380 = vpop.permute.xlu0 %379
        %381 = vrot.lane.b32.xlu0 %v189, 3
        %v382 = vpop.permute.xlu0 %381
        %383 = vrot.lane.b32.xlu0 %v188, 3
        %v384 = vpop.permute.xlu0 %383
        %vm385 = vcmp.ge.s32.totalorder %v163, 3
        %v386 = vsel %vm385, 1, 0
        %vm387 = vcmp.eq.s32.totalorder %v386, 1
        %v388 = vsel %vm387, %v368, 0.0
        %v389 = vsel %vm387, %v370, 0.0
        %v390 = vsel %vm387, %v372, 0.0
        %v391 = vsel %vm387, %v374, 0.0
        %v392 = vsel %vm387, %v376, 0.0
        %v393 = vsel %vm387, %v378, 0.0
        %v394 = vsel %vm387, %v380, 0.0
        %v395 = vsel %vm387, %v382, 0.0
        %v396 = vsel %vm387, %v384, 0.0
        %v397 = vsub.f32 %v358, %v388
        %v398 = vsub.f32 %v359, %v389
        %v399 = vsub.f32 %v360, %v390
        %v400 = vsub.f32 %v361, %v391
        %v401 = vsub.f32 %v362, %v392
        %v402 = vsub.f32 %v363, %v393
        %v403 = vsub.f32 %v364, %v394
        %v404 = vsub.f32 %v365, %v395
        %v405 = vsub.f32 %v366, %v396
        %v406 = vadd.f32 %v259, %v328
        %v407 = vadd.f32 %v260, %v329
        %v408 = vadd.f32 %v261, %v330
        %v409 = vadd.f32 %v262, %v331
        %v410 = vadd.f32 %v263, %v332
        %v411 = vadd.f32 %v264, %v333
        %v412 = vadd.f32 %v265, %v334
        %v413 = vadd.f32 %v266, %v335
        %v414 = vadd.f32 %v267, %v336
        %v415 = vadd.f32 %v406, %v397
        %v416 = vadd.f32 %v407, %v398
        %v417 = vadd.f32 %v408, %v399
        %v418 = vadd.f32 %v409, %v400
        %v419 = vadd.f32 %v410, %v401
        %v420 = vadd.f32 %v411, %v402
        %v421 = vadd.f32 %v412, %v403
        %v422 = vadd.f32 %v413, %v404
        %v423 = vadd.f32 %v414, %v405
        %v424 = vmul.f32 %v415, 0.33333334
        %v425 = vmul.f32 %v416, 0.33333334
        %v426 = vmul.f32 %v417, 0.33333334
        %v427 = vmul.f32 %v418, 0.33333334
        %v428 = vmul.f32 %v419, 0.33333334
        %v429 = vmul.f32 %v420, 0.33333334
        %v430 = vmul.f32 %v421, 0.33333334
        %v431 = vmul.f32 %v422, 0.33333334
        %v432 = vmul.f32 %v423, 0.33333334
        %v433 = vand.u32 2147483647, %v259
        %v434 = vand.u32 2147483647, %v260
        %v435 = vand.u32 2147483647, %v261
        %v436 = vand.u32 2147483647, %v262
        %v437 = vand.u32 2147483647, %v263
        %v438 = vand.u32 2147483647, %v264
        %v439 = vand.u32 2147483647, %v265
        %v440 = vand.u32 2147483647, %v266
        %v441 = vand.u32 2147483647, %v267
        %v442 = vsub.f32 %v259, %v424
        %v443 = vsub.f32 %v260, %v425
        %v444 = vsub.f32 %v261, %v426
        %v445 = vsub.f32 %v262, %v427
        %v446 = vsub.f32 %v263, %v428
        %v447 = vsub.f32 %v264, %v429
        %v448 = vsub.f32 %v265, %v430
        %v449 = vsub.f32 %v266, %v431
        %v450 = vsub.f32 %v267, %v432
        %v451 = vand.u32 2147483647, %v442
        %v452 = vand.u32 2147483647, %v443
        %v453 = vand.u32 2147483647, %v444
        %v454 = vand.u32 2147483647, %v445
        %v455 = vand.u32 2147483647, %v446
        %v456 = vand.u32 2147483647, %v447
        %v457 = vand.u32 2147483647, %v448
        %v458 = vand.u32 2147483647, %v449
        %v459 = vand.u32 2147483647, %v450
        %vm460 = vcmp.gt.f32.partialorder %v451, 0.00048875855
        %vm461 = vcmp.gt.f32.partialorder %v452, 0.00048875855
        %vm462 = vcmp.gt.f32.partialorder %v453, 0.00048875855
        %vm463 = vcmp.gt.f32.partialorder %v454, 0.00048875855
        %vm464 = vcmp.gt.f32.partialorder %v455, 0.00048875855
        %vm465 = vcmp.gt.f32.partialorder %v456, 0.00048875855
        %vm466 = vcmp.gt.f32.partialorder %v457, 0.00048875855
        %vm467 = vcmp.gt.f32.partialorder %v458, 0.00048875855
        %vm468 = vcmp.gt.f32.partialorder %v459, 0.00048875855
        %vm469 = vcmp.lt.f32.partialorder %v433, 0.0009775171
        %vm470 = vcmp.lt.f32.partialorder %v434, 0.0009775171
        %vm471 = vcmp.lt.f32.partialorder %v435, 0.0009775171
        %vm472 = vcmp.lt.f32.partialorder %v436, 0.0009775171
        %vm473 = vcmp.lt.f32.partialorder %v437, 0.0009775171
        %vm474 = vcmp.lt.f32.partialorder %v438, 0.0009775171
        %vm475 = vcmp.lt.f32.partialorder %v439, 0.0009775171
        %vm476 = vcmp.lt.f32.partialorder %v440, 0.0009775171
        %vm477 = vcmp.lt.f32.partialorder %v441, 0.0009775171
        %vm478 = vmor %vm460, %vm469
        %vm479 = vmor %vm461, %vm470
        %vm480 = vmor %vm462, %vm471
        %vm481 = vmor %vm463, %vm472
        %vm482 = vmor %vm464, %vm473
        %vm483 = vmor %vm465, %vm474
        %vm484 = vmor %vm466, %vm475
        %vm485 = vmor %vm467, %vm476
        %vm486 = vmor %vm468, %vm477
        %vm487 = vcmp.gt.f32.partialorder %v433, 0.0039100684
        %vm488 = vcmp.gt.f32.partialorder %v434, 0.0039100684
        %vm489 = vcmp.gt.f32.partialorder %v435, 0.0039100684
        %vm490 = vcmp.gt.f32.partialorder %v436, 0.0039100684
        %vm491 = vcmp.gt.f32.partialorder %v437, 0.0039100684
        %vm492 = vcmp.gt.f32.partialorder %v438, 0.0039100684
        %vm493 = vcmp.gt.f32.partialorder %v439, 0.0039100684
        %vm494 = vcmp.gt.f32.partialorder %v440, 0.0039100684
        %vm495 = vcmp.gt.f32.partialorder %v441, 0.0039100684
        %vm496 = vmor %vm478, %vm487
        %vm497 = vmor %vm479, %vm488
        %vm498 = vmor %vm480, %vm489
        %vm499 = vmor %vm481, %vm490
        %vm500 = vmor %vm482, %vm491
        %vm501 = vmor %vm483, %vm492
        %vm502 = vmor %vm484, %vm493
        %vm503 = vmor %vm485, %vm494
        %vm504 = vmor %vm486, %vm495
        %v505 = vsel %vm496, 0.0, %v433
        %v506 = vsel %vm497, 0.0, %v434
        %v507 = vsel %vm498, 0.0, %v435
        %v508 = vsel %vm499, 0.0, %v436
        %v509 = vsel %vm500, 0.0, %v437
        %v510 = vsel %vm501, 0.0, %v438
        %v511 = vsel %vm502, 0.0, %v439
        %v512 = vsel %vm503, 0.0, %v440
        %v513 = vsel %vm504, 0.0, %v441
        %vm514 = vcmask 1041408
        %v515 = vrot.slane %v150, 6
        %v516 = vrot.slane %v151, 6
        %v517 = vsel %vm514, %v515, %v516
        %v518 = vrot.slane %v152, 6
        %v519 = vsel %vm514, %v516, %v518
        %v520 = vrot.slane %v154, 6
        %v521 = vrot.slane %v155, 6
        %v522 = vsel %vm514, %v520, %v521
        %v523 = vrot.slane %v156, 6
        %v524 = vsel %vm514, %v521, %v523
        %v525 = vrot.slane %v158, 6
        %v526 = vrot.slane %v159, 6
        %v527 = vsel %vm514, %v525, %v526
        %v528 = vrot.slane %v160, 6
        %v529 = vsel %vm514, %v526, %v528
        %v539 = vsub.f32 %v150, %v515
        %v540 = vsub.f32 %v151, %v517
        %v541 = vsub.f32 %v152, %v519
        %v542 = vsub.f32 %v154, %v520
        %v543 = vsub.f32 %v155, %v522
        %v544 = vsub.f32 %v156, %v524
        %v545 = vsub.f32 %v158, %v525
        %v546 = vsub.f32 %v159, %v527
        %v547 = vsub.f32 %v160, %v529
        %vm548 = vcmask 1043456
        %v549 = vrot.slane %v150, 4
        %v550 = vrot.slane %v151, 4
        %v551 = vsel %vm548, %v549, %v550
        %v552 = vrot.slane %v152, 4
        %v553 = vsel %vm548, %v550, %v552
        %v554 = vrot.slane %v154, 4
        %v555 = vrot.slane %v155, 4
        %v556 = vsel %vm548, %v554, %v555
        %v557 = vrot.slane %v156, 4
        %v558 = vsel %vm548, %v555, %v557
        %v559 = vrot.slane %v158, 4
        %v560 = vrot.slane %v159, 4
        %v561 = vsel %vm548, %v559, %v560
        %v562 = vrot.slane %v160, 4
        %v563 = vsel %vm548, %v560, %v562
        %v576 = vsub.f32 %v150, %v549
        %v577 = vsub.f32 %v151, %v551
        %v578 = vsub.f32 %v152, %v553
        %v579 = vsub.f32 %v153, %v552
        %v580 = vsub.f32 %v154, %v554
        %v581 = vsub.f32 %v155, %v556
        %v582 = vsub.f32 %v156, %v558
        %v583 = vsub.f32 %v157, %v557
        %v584 = vsub.f32 %v158, %v559
        %v585 = vsub.f32 %v159, %v561
        %v586 = vsub.f32 %v160, %v563
        %v587 = vsub.f32 %v161, %v562
        %vm588 = vcmask 1045504
        %v589 = vrot.slane %v150, 2
        %v590 = vrot.slane %v151, 2
        %v591 = vsel %vm588, %v589, %v590
        %v592 = vrot.slane %v152, 2
        %v593 = vsel %vm588, %v590, %v592
        %v594 = vrot.slane %v154, 2
        %v595 = vrot.slane %v155, 2
        %v596 = vsel %vm588, %v594, %v595
        %v597 = vrot.slane %v156, 2
        %v598 = vsel %vm588, %v595, %v597
        %v599 = vrot.slane %v158, 2
        %v600 = vrot.slane %v159, 2
        %v601 = vsel %vm588, %v599, %v600
        %v602 = vrot.slane %v160, 2
        %v603 = vsel %vm588, %v600, %v602
        %v616 = vsub.f32 %v150, %v589
        %v617 = vsub.f32 %v151, %v591
        %v618 = vsub.f32 %v152, %v593
        %v619 = vsub.f32 %v153, %v592
        %v620 = vsub.f32 %v154, %v594
        %v621 = vsub.f32 %v155, %v596
        %v622 = vsub.f32 %v156, %v598
        %v623 = vsub.f32 %v157, %v597
        %v624 = vsub.f32 %v158, %v599
        %v625 = vsub.f32 %v159, %v601
        %v626 = vsub.f32 %v160, %v603
        %v627 = vsub.f32 %v161, %v602
        %vm640 = vcmask 1046528
        %v641 = vrot.slane %v576, 1
        %v642 = vrot.slane %v577, 1
        %v643 = vsel %vm640, %v641, %v642
        %v644 = vrot.slane %v578, 1
        %v645 = vsel %vm640, %v642, %v644
        %v646 = vrot.slane %v579, 1
        %v647 = vsel %vm640, %v644, %v646
        %v648 = vrot.slane %v580, 1
        %v649 = vrot.slane %v581, 1
        %v650 = vsel %vm640, %v648, %v649
        %v651 = vrot.slane %v582, 1
        %v652 = vsel %vm640, %v649, %v651
        %v653 = vrot.slane %v583, 1
        %v654 = vsel %vm640, %v651, %v653
        %v655 = vrot.slane %v584, 1
        %v656 = vrot.slane %v585, 1
        %v657 = vsel %vm640, %v655, %v656
        %v658 = vrot.slane %v586, 1
        %v659 = vsel %vm640, %v656, %v658
        %v660 = vrot.slane %v587, 1
        %v661 = vsel %vm640, %v658, %v660
        %v671 = vadd.f32 %v539, %v643
        %v672 = vadd.f32 %v540, %v645
        %v673 = vadd.f32 %v541, %v647
        %v674 = vadd.f32 %v542, %v650
        %v675 = vadd.f32 %v543, %v652
        %v676 = vadd.f32 %v544, %v654
        %v677 = vadd.f32 %v545, %v657
        %v678 = vadd.f32 %v546, %v659
        %v679 = vadd.f32 %v547, %v661
        %v692 = vrot.slane %v616, 2
        %v693 = vrot.slane %v617, 2
        %v694 = vsel %vm588, %v692, %v693
        %v695 = vrot.slane %v618, 2
        %v696 = vsel %vm588, %v693, %v695
        %v697 = vrot.slane %v619, 2
        %v698 = vsel %vm588, %v695, %v697
        %v699 = vrot.slane %v620, 2
        %v700 = vrot.slane %v621, 2
        %v701 = vsel %vm588, %v699, %v700
        %v702 = vrot.slane %v622, 2
        %v703 = vsel %vm588, %v700, %v702
        %v704 = vrot.slane %v623, 2
        %v705 = vsel %vm588, %v702, %v704
        %v706 = vrot.slane %v624, 2
        %v707 = vrot.slane %v625, 2
        %v708 = vsel %vm588, %v706, %v707
        %v709 = vrot.slane %v626, 2
        %v710 = vsel %vm588, %v707, %v709
        %v711 = vrot.slane %v627, 2
        %v712 = vsel %vm588, %v709, %v711
        %v722 = vadd.f32 %v671, %v694
        %v723 = vadd.f32 %v672, %v696
        %v724 = vadd.f32 %v673, %v698
        %v725 = vadd.f32 %v674, %v701
        %v726 = vadd.f32 %v675, %v703
        %v727 = vadd.f32 %v676, %v705
        %v728 = vadd.f32 %v677, %v708
        %v729 = vadd.f32 %v678, %v710
        %v730 = vadd.f32 %v679, %v712
        %v731 = vmul.f32 %v722, 0.33333334
        %v732 = vmul.f32 %v723, 0.33333334
        %v733 = vmul.f32 %v724, 0.33333334
        %v734 = vmul.f32 %v725, 0.33333334
        %v735 = vmul.f32 %v726, 0.33333334
        %v736 = vmul.f32 %v727, 0.33333334
        %v737 = vmul.f32 %v728, 0.33333334
        %v738 = vmul.f32 %v729, 0.33333334
        %v739 = vmul.f32 %v730, 0.33333334
        %v740 = vand.u32 2147483647, %v539
        %v741 = vand.u32 2147483647, %v540
        %v742 = vand.u32 2147483647, %v541
        %v743 = vand.u32 2147483647, %v542
        %v744 = vand.u32 2147483647, %v543
        %v745 = vand.u32 2147483647, %v544
        %v746 = vand.u32 2147483647, %v545
        %v747 = vand.u32 2147483647, %v546
        %v748 = vand.u32 2147483647, %v547
        %v749 = vsub.f32 %v539, %v731
        %v750 = vsub.f32 %v540, %v732
        %v751 = vsub.f32 %v541, %v733
        %v752 = vsub.f32 %v542, %v734
        %v753 = vsub.f32 %v543, %v735
        %v754 = vsub.f32 %v544, %v736
        %v755 = vsub.f32 %v545, %v737
        %v756 = vsub.f32 %v546, %v738
        %v757 = vsub.f32 %v547, %v739
        %v758 = vand.u32 2147483647, %v749
        %v759 = vand.u32 2147483647, %v750
        %v760 = vand.u32 2147483647, %v751
        %v761 = vand.u32 2147483647, %v752
        %v762 = vand.u32 2147483647, %v753
        %v763 = vand.u32 2147483647, %v754
        %v764 = vand.u32 2147483647, %v755
        %v765 = vand.u32 2147483647, %v756
        %v766 = vand.u32 2147483647, %v757
        %vm767 = vcmp.gt.f32.partialorder %v758, 0.00048875855
        %vm768 = vcmp.gt.f32.partialorder %v759, 0.00048875855
        %vm769 = vcmp.gt.f32.partialorder %v760, 0.00048875855
        %vm770 = vcmp.gt.f32.partialorder %v761, 0.00048875855
        %vm771 = vcmp.gt.f32.partialorder %v762, 0.00048875855
        %vm772 = vcmp.gt.f32.partialorder %v763, 0.00048875855
        %vm773 = vcmp.gt.f32.partialorder %v764, 0.00048875855
        %vm774 = vcmp.gt.f32.partialorder %v765, 0.00048875855
        %vm775 = vcmp.gt.f32.partialorder %v766, 0.00048875855
        %vm776 = vcmp.lt.f32.partialorder %v740, 0.0009775171
        %vm777 = vcmp.lt.f32.partialorder %v741, 0.0009775171
        %vm778 = vcmp.lt.f32.partialorder %v742, 0.0009775171
        %vm779 = vcmp.lt.f32.partialorder %v743, 0.0009775171
        %vm780 = vcmp.lt.f32.partialorder %v744, 0.0009775171
        %vm781 = vcmp.lt.f32.partialorder %v745, 0.0009775171
        %vm782 = vcmp.lt.f32.partialorder %v746, 0.0009775171
        %vm783 = vcmp.lt.f32.partialorder %v747, 0.0009775171
        %vm784 = vcmp.lt.f32.partialorder %v748, 0.0009775171
        %vm785 = vmor %vm767, %vm776
        %vm786 = vmor %vm768, %vm777
        %vm787 = vmor %vm769, %vm778
        %vm788 = vmor %vm770, %vm779
        %vm789 = vmor %vm771, %vm780
        %vm790 = vmor %vm772, %vm781
        %vm791 = vmor %vm773, %vm782
        %vm792 = vmor %vm774, %vm783
        %vm793 = vmor %vm775, %vm784
        %vm794 = vcmp.gt.f32.partialorder %v740, 0.0039100684
        %vm795 = vcmp.gt.f32.partialorder %v741, 0.0039100684
        %vm796 = vcmp.gt.f32.partialorder %v742, 0.0039100684
        %vm797 = vcmp.gt.f32.partialorder %v743, 0.0039100684
        %vm798 = vcmp.gt.f32.partialorder %v744, 0.0039100684
        %vm799 = vcmp.gt.f32.partialorder %v745, 0.0039100684
        %vm800 = vcmp.gt.f32.partialorder %v746, 0.0039100684
        %vm801 = vcmp.gt.f32.partialorder %v747, 0.0039100684
        %vm802 = vcmp.gt.f32.partialorder %v748, 0.0039100684
        %vm803 = vmor %vm785, %vm794
        %vm804 = vmor %vm786, %vm795
        %vm805 = vmor %vm787, %vm796
        %vm806 = vmor %vm788, %vm797
        %vm807 = vmor %vm789, %vm798
        %vm808 = vmor %vm790, %vm799
        %vm809 = vmor %vm791, %vm800
        %vm810 = vmor %vm792, %vm801
        %vm811 = vmor %vm793, %vm802
        %v812 = vsel %vm803, 0.0, %v740
        %v813 = vsel %vm804, 0.0, %v741
        %v814 = vsel %vm805, 0.0, %v742
        %v815 = vsel %vm806, 0.0, %v743
        %v816 = vsel %vm807, 0.0, %v744
        %v817 = vsel %vm808, 0.0, %v745
        %v818 = vsel %vm809, 0.0, %v746
        %v819 = vsel %vm810, 0.0, %v747
        %v820 = vsel %vm811, 0.0, %v748
        %v830 = vrot.slane %v812, 4
        %v831 = vrot.slane %v813, 4
        %v832 = vsel %vm548, %v830, %v831
        %v833 = vrot.slane %v814, 4
        %v834 = vsel %vm548, %v831, %v833
        %v835 = vrot.slane %v815, 4
        %v836 = vrot.slane %v816, 4
        %v837 = vsel %vm548, %v835, %v836
        %v838 = vrot.slane %v817, 4
        %v839 = vsel %vm548, %v836, %v838
        %v840 = vrot.slane %v818, 4
        %v841 = vrot.slane %v819, 4
        %v842 = vsel %vm548, %v840, %v841
        %v843 = vrot.slane %v820, 4
        %v844 = vsel %vm548, %v841, %v843
        %v854 = vmax.f32 %v505, %v832
        %v855 = vmax.f32 %v506, %v834
        %v856 = vmax.f32 %v507, %v833
        %v857 = vmax.f32 %v508, %v837
        %v858 = vmax.f32 %v509, %v839
        %v859 = vmax.f32 %v510, %v838
        %v860 = vmax.f32 %v511, %v842
        %v861 = vmax.f32 %v512, %v844
        %v862 = vmax.f32 %v513, %v843
        %v863 = vmul.f32 %v854, 255.75
        %v864 = vmul.f32 %v855, 255.75
        %v865 = vmul.f32 %v856, 255.75
        %v866 = vmul.f32 %v857, 255.75
        %v867 = vmul.f32 %v858, 255.75
        %v868 = vmul.f32 %v859, 255.75
        %v869 = vmul.f32 %v860, 255.75
        %v870 = vmul.f32 %v861, 255.75
        %v871 = vmul.f32 %v862, 255.75
        %v872 = vlaneseq
        %v873 = vshrl.u32 %v872, 7
        %v874 = vadd.s32 %v873, 8
        %v875 = vadd.s32 %v873, 16
        %s876 = sadd.s32 %s164, 4294967294
        %v877 = vstv %s876
        %v878 = vadd.s32 %v873, %v877
        %v879 = vadd.s32 %v874, %v877
        %v880 = vadd.s32 %v875, %v877
        %vm881 = vcmp.ge.s32.totalorder %v878, 0
        %vm882 = vcmp.ge.s32.totalorder %v879, 0
        %vm883 = vcmp.ge.s32.totalorder %v880, 0
        %vm884 = vcmp.lt.s32.totalorder %v878, 16
        %vm885 = vcmp.lt.s32.totalorder %v879, 16
        %vm886 = vcmp.lt.s32.totalorder %v880, 16
        %vm887 = vmand %vm881, %vm884
        %vm888 = vmand %vm882, %vm885
        %vm889 = vmand %vm883, %vm886
        %v890 = vsel %vm887, 1, 0
        %v891 = vsel %vm888, 1, 0
        %v892 = vsel %vm889, 1, 0
        %vm893 = vcmp.eq.s32.totalorder %v890, 1
        %vm894 = vcmp.eq.s32.totalorder %v891, 1
        %vm895 = vcmp.eq.s32.totalorder %v892, 1
        %v896 = vsel %vm893, %v863, -10000.0
        %v897 = vsel %vm894, %v864, -10000.0
        %v898 = vsel %vm895, %v865, -10000.0
        %v899 = vsel %vm893, %v866, -10000.0
        %v900 = vsel %vm894, %v867, -10000.0
        %v901 = vsel %vm895, %v868, -10000.0
        %v902 = vsel %vm893, %v869, -10000.0
        %v903 = vsel %vm894, %v870, -10000.0
        %v904 = vsel %vm895, %v871, -10000.0
        %v914 = vrot.slane %v896, 1
        %v915 = vrot.slane %v897, 1
        %v916 = vsel %vm640, %v914, %v915
        %v917 = vrot.slane %v898, 1
        %v918 = vsel %vm640, %v915, %v917
        %v919 = vrot.slane %v899, 1
        %v920 = vrot.slane %v900, 1
        %v921 = vsel %vm640, %v919, %v920
        %v922 = vrot.slane %v901, 1
        %v923 = vsel %vm640, %v920, %v922
        %v924 = vrot.slane %v902, 1
        %v925 = vrot.slane %v903, 1
        %v926 = vsel %vm640, %v924, %v925
        %v927 = vrot.slane %v904, 1
        %v928 = vsel %vm640, %v925, %v927
        %v938 = vmax.f32 %v896, %v916
        %v939 = vmax.f32 %v897, %v918
        %v940 = vmax.f32 %v898, %v917
        %v941 = vmax.f32 %v899, %v921
        %v942 = vmax.f32 %v900, %v923
        %v943 = vmax.f32 %v901, %v922
        %v944 = vmax.f32 %v902, %v926
        %v945 = vmax.f32 %v903, %v928
        %v946 = vmax.f32 %v904, %v927
        %v947 = vrot.slane %v896, 2
        %v948 = vrot.slane %v897, 2
        %v949 = vsel %vm588, %v947, %v948
        %v950 = vrot.slane %v898, 2
        %v951 = vsel %vm588, %v948, %v950
        %v952 = vrot.slane %v899, 2
        %v953 = vrot.slane %v900, 2
        %v954 = vsel %vm588, %v952, %v953
        %v955 = vrot.slane %v901, 2
        %v956 = vsel %vm588, %v953, %v955
        %v957 = vrot.slane %v902, 2
        %v958 = vrot.slane %v903, 2
        %v959 = vsel %vm588, %v957, %v958
        %v960 = vrot.slane %v904, 2
        %v961 = vsel %vm588, %v958, %v960
        %v971 = vmax.f32 %v938, %v949
        %v972 = vmax.f32 %v939, %v951
        %v973 = vmax.f32 %v940, %v950
        %v974 = vmax.f32 %v941, %v954
        %v975 = vmax.f32 %v942, %v956
        %v976 = vmax.f32 %v943, %v955
        %v977 = vmax.f32 %v944, %v959
        %v978 = vmax.f32 %v945, %v961
        %v979 = vmax.f32 %v946, %v960
        %980 = vrot.lane.b32.xlu0 %v971, 127
        %v981 = vpop.permute.xlu0 %980
        %982 = vrot.lane.b32.xlu0 %v972, 127
        %v983 = vpop.permute.xlu0 %982
        %984 = vrot.lane.b32.xlu0 %v973, 127
        %v985 = vpop.permute.xlu0 %984
        %986 = vrot.lane.b32.xlu0 %v974, 127
        %v987 = vpop.permute.xlu0 %986
        %988 = vrot.lane.b32.xlu0 %v975, 127
        %v989 = vpop.permute.xlu0 %988
        %990 = vrot.lane.b32.xlu0 %v976, 127
        %v991 = vpop.permute.xlu0 %990
        %992 = vrot.lane.b32.xlu0 %v977, 127
        %v993 = vpop.permute.xlu0 %992
        %994 = vrot.lane.b32.xlu0 %v978, 127
        %v995 = vpop.permute.xlu0 %994
        %996 = vrot.lane.b32.xlu0 %v979, 127
        %v997 = vpop.permute.xlu0 %996
        %v998 = vsel %vm219, %v981, -10000.0
        %v999 = vsel %vm219, %v983, -10000.0
        %v1000 = vsel %vm219, %v985, -10000.0
        %v1001 = vsel %vm219, %v987, -10000.0
        %v1002 = vsel %vm219, %v989, -10000.0
        %v1003 = vsel %vm219, %v991, -10000.0
        %v1004 = vsel %vm219, %v993, -10000.0
        %v1005 = vsel %vm219, %v995, -10000.0
        %v1006 = vsel %vm219, %v997, -10000.0
        %v1007 = vmax.f32 %v998, %v971
        %v1008 = vmax.f32 %v999, %v972
        %v1009 = vmax.f32 %v1000, %v973
        %v1010 = vmax.f32 %v1001, %v974
        %v1011 = vmax.f32 %v1002, %v975
        %v1012 = vmax.f32 %v1003, %v976
        %v1013 = vmax.f32 %v1004, %v977
        %v1014 = vmax.f32 %v1005, %v978
        %v1015 = vmax.f32 %v1006, %v979
        %1016 = vrot.lane.b32.xlu0 %v971, 1
        %v1017 = vpop.permute.xlu0 %1016
        %1018 = vrot.lane.b32.xlu0 %v972, 1
        %v1019 = vpop.permute.xlu0 %1018
        %1020 = vrot.lane.b32.xlu0 %v973, 1
        %v1021 = vpop.permute.xlu0 %1020
        %1022 = vrot.lane.b32.xlu0 %v974, 1
        %v1023 = vpop.permute.xlu0 %1022
        %1024 = vrot.lane.b32.xlu0 %v975, 1
        %v1025 = vpop.permute.xlu0 %1024
        %1026 = vrot.lane.b32.xlu0 %v976, 1
        %v1027 = vpop.permute.xlu0 %1026
        %1028 = vrot.lane.b32.xlu0 %v977, 1
        %v1029 = vpop.permute.xlu0 %1028
        %1030 = vrot.lane.b32.xlu0 %v978, 1
        %v1031 = vpop.permute.xlu0 %1030
        %1032 = vrot.lane.b32.xlu0 %v979, 1
        %v1033 = vpop.permute.xlu0 %1032
        %v1034 = vsel %vm249, %v1017, -10000.0
        %v1035 = vsel %vm249, %v1019, -10000.0
        %v1036 = vsel %vm249, %v1021, -10000.0
        %v1037 = vsel %vm249, %v1023, -10000.0
        %v1038 = vsel %vm249, %v1025, -10000.0
        %v1039 = vsel %vm249, %v1027, -10000.0
        %v1040 = vsel %vm249, %v1029, -10000.0
        %v1041 = vsel %vm249, %v1031, -10000.0
        %v1042 = vsel %vm249, %v1033, -10000.0
        %v1043 = vmax.f32 %v1007, %v1034
        %v1044 = vmax.f32 %v1008, %v1035
        %v1045 = vmax.f32 %v1009, %v1036
        %v1046 = vmax.f32 %v1010, %v1037
        %v1047 = vmax.f32 %v1011, %v1038
        %v1048 = vmax.f32 %v1012, %v1039
        %v1049 = vmax.f32 %v1013, %v1040
        %v1050 = vmax.f32 %v1014, %v1041
        %v1051 = vmax.f32 %v1015, %v1042
        %vm1061 = vcmask 1040384
        %v1062 = vrot.slane %v1043, 7
        %v1063 = vrot.slane %v1044, 7
        %v1064 = vsel %vm1061, %v1062, %v1063
        %v1065 = vrot.slane %v1045, 7
        %v1066 = vsel %vm1061, %v1063, %v1065
        %v1067 = vrot.slane %v1046, 7
        %v1068 = vrot.slane %v1047, 7
        %v1069 = vsel %vm1061, %v1067, %v1068
        %v1070 = vrot.slane %v1048, 7
        %v1071 = vsel %vm1061, %v1068, %v1070
        %v1072 = vrot.slane %v1049, 7
        %v1073 = vrot.slane %v1050, 7
        %v1074 = vsel %vm1061, %v1072, %v1073
        %v1075 = vrot.slane %v1051, 7
        %v1076 = vsel %vm1061, %v1073, %v1075
        %v1086 = vsel %vm893, %v1062, 10000.0
        %v1087 = vsel %vm894, %v1064, 10000.0
        %v1088 = vsel %vm895, %v1066, 10000.0
        %v1089 = vsel %vm893, %v1067, 10000.0
        %v1090 = vsel %vm894, %v1069, 10000.0
        %v1091 = vsel %vm895, %v1071, 10000.0
        %v1092 = vsel %vm893, %v1072, 10000.0
        %v1093 = vsel %vm894, %v1074, 10000.0
        %v1094 = vsel %vm895, %v1076, 10000.0
        %v1104 = vrot.slane %v1086, 1
        %v1105 = vrot.slane %v1087, 1
        %v1106 = vsel %vm640, %v1104, %v1105
        %v1107 = vrot.slane %v1088, 1
        %v1108 = vsel %vm640, %v1105, %v1107
        %v1109 = vrot.slane %v1089, 1
        %v1110 = vrot.slane %v1090, 1
        %v1111 = vsel %vm640, %v1109, %v1110
        %v1112 = vrot.slane %v1091, 1
        %v1113 = vsel %vm640, %v1110, %v1112
        %v1114 = vrot.slane %v1092, 1
        %v1115 = vrot.slane %v1093, 1
        %v1116 = vsel %vm640, %v1114, %v1115
        %v1117 = vrot.slane %v1094, 1
        %v1118 = vsel %vm640, %v1115, %v1117
        %v1128 = vmin.f32 %v1086, %v1106
        %v1129 = vmin.f32 %v1087, %v1108
        %v1130 = vmin.f32 %v1088, %v1107
        %v1131 = vmin.f32 %v1089, %v1111
        %v1132 = vmin.f32 %v1090, %v1113
        %v1133 = vmin.f32 %v1091, %v1112
        %v1134 = vmin.f32 %v1092, %v1116
        %v1135 = vmin.f32 %v1093, %v1118
        %v1136 = vmin.f32 %v1094, %v1117
        %v1137 = vrot.slane %v1086, 2
        %v1138 = vrot.slane %v1087, 2
        %v1139 = vsel %vm588, %v1137, %v1138
        %v1140 = vrot.slane %v1088, 2
        %v1141 = vsel %vm588, %v1138, %v1140
        %v1142 = vrot.slane %v1089, 2
        %v1143 = vrot.slane %v1090, 2
        %v1144 = vsel %vm588, %v1142, %v1143
        %v1145 = vrot.slane %v1091, 2
        %v1146 = vsel %vm588, %v1143, %v1145
        %v1147 = vrot.slane %v1092, 2
        %v1148 = vrot.slane %v1093, 2
        %v1149 = vsel %vm588, %v1147, %v1148
        %v1150 = vrot.slane %v1094, 2
        %v1151 = vsel %vm588, %v1148, %v1150
        %v1161 = vmin.f32 %v1128, %v1139
        %v1162 = vmin.f32 %v1129, %v1141
        %v1163 = vmin.f32 %v1130, %v1140
        %v1164 = vmin.f32 %v1131, %v1144
        %v1165 = vmin.f32 %v1132, %v1146
        %v1166 = vmin.f32 %v1133, %v1145
        %v1167 = vmin.f32 %v1134, %v1149
        %v1168 = vmin.f32 %v1135, %v1151
        %v1169 = vmin.f32 %v1136, %v1150
        %v1179 = vrot.slane %v1161, 1
        %v1180 = vrot.slane %v1162, 1
        %v1181 = vsel %vm640, %v1179, %v1180
        %v1182 = vrot.slane %v1163, 1
        %v1183 = vsel %vm640, %v1180, %v1182
        %v1184 = vrot.slane %v1164, 1
        %v1185 = vrot.slane %v1165, 1
        %v1186 = vsel %vm640, %v1184, %v1185
        %v1187 = vrot.slane %v1166, 1
        %v1188 = vsel %vm640, %v1185, %v1187
        %v1189 = vrot.slane %v1167, 1
        %v1190 = vrot.slane %v1168, 1
        %v1191 = vsel %vm640, %v1189, %v1190
        %v1192 = vrot.slane %v1169, 1
        %v1193 = vsel %vm640, %v1190, %v1192
        %1200 = vrot.lane.b32.xlu0 %v1181, 127
        %v1201 = vpop.permute.xlu0 %1200
        %1202 = vrot.lane.b32.xlu0 %v1183, 127
        %v1203 = vpop.permute.xlu0 %1202
        %1204 = vrot.lane.b32.xlu0 %v1186, 127
        %v1205 = vpop.permute.xlu0 %1204
        %1206 = vrot.lane.b32.xlu0 %v1188, 127
        %v1207 = vpop.permute.xlu0 %1206
        %1208 = vrot.lane.b32.xlu0 %v1191, 127
        %v1209 = vpop.permute.xlu0 %1208
        %1210 = vrot.lane.b32.xlu0 %v1193, 127
        %v1211 = vpop.permute.xlu0 %1210
        %v1212 = vsel %vm219, %v1201, 10000.0
        %v1213 = vsel %vm219, %v1203, 10000.0
        %v1214 = vsel %vm219, %v1205, 10000.0
        %v1215 = vsel %vm219, %v1207, 10000.0
        %v1216 = vsel %vm219, %v1209, 10000.0
        %v1217 = vsel %vm219, %v1211, 10000.0
        %v1218 = vmin.f32 %v1212, %v1181
        %v1219 = vmin.f32 %v1213, %v1183
        %v1220 = vmin.f32 %v1214, %v1186
        %v1221 = vmin.f32 %v1215, %v1188
        %v1222 = vmin.f32 %v1216, %v1191
        %v1223 = vmin.f32 %v1217, %v1193
        %1224 = vrot.lane.b32.xlu0 %v1181, 1
        %v1225 = vpop.permute.xlu0 %1224
        %1226 = vrot.lane.b32.xlu0 %v1183, 1
        %v1227 = vpop.permute.xlu0 %1226
        %1228 = vrot.lane.b32.xlu0 %v1186, 1
        %v1229 = vpop.permute.xlu0 %1228
        %1230 = vrot.lane.b32.xlu0 %v1188, 1
        %v1231 = vpop.permute.xlu0 %1230
        %1232 = vrot.lane.b32.xlu0 %v1191, 1
        %v1233 = vpop.permute.xlu0 %1232
        %1234 = vrot.lane.b32.xlu0 %v1193, 1
        %v1235 = vpop.permute.xlu0 %1234
        %v1236 = vsel %vm249, %v1225, 10000.0
        %v1237 = vsel %vm249, %v1227, 10000.0
        %v1238 = vsel %vm249, %v1229, 10000.0
        %v1239 = vsel %vm249, %v1231, 10000.0
        %v1240 = vsel %vm249, %v1233, 10000.0
        %v1241 = vsel %vm249, %v1235, 10000.0
        %v1242 = vmin.f32 %v1218, %v1236
        %v1243 = vmin.f32 %v1219, %v1237
        %v1244 = vmin.f32 %v1220, %v1238
        %v1245 = vmin.f32 %v1221, %v1239
        %v1246 = vmin.f32 %v1222, %v1240
        %v1247 = vmin.f32 %v1223, %v1241
        %1248 = vst [vmem:[%s136] sm:$0xff] %v1242
        %1249 = vst [vmem:[%s136 + $0x8] sm:$0xff] %v1243
        %1250 = vst [vmem:[%s136 + $0x10] sm:$0xff] %v1244
        %1251 = vst [vmem:[%s136 + $0x18] sm:$0xff] %v1245
        %1252 = vst [vmem:[%s136 + $0x20] sm:$0xff] %v1246
        %1253 = vst [vmem:[%s136 + $0x28] sm:$0xff] %v1247
        %s1254 = sand.u32 %s65, 1
        %s1255 = scalar_lea.sflag [#allocation3], %s1254
        %s1256 = sand.u32 %s65, 1
        %s1257 = smul.addr %s1256, 48
        %s1258 = scalar_lea.vmem [#allocation2], %s1257
        // Predicated region
        $region25: #{tpu_custom_call.1} parent=23 // pred_check
          %p1259 = pneg %p75
        $region26: #{tpu_custom_call.1} parent=23 // pred_check_branch
          %1261 = sbr.rel (%p1259) target = $region28
        $region27: #{tpu_custom_call.1} parent=23 // pred_region
          %s1262 = smul.u32 3, %s19
          %s1263 = smul.u32 2, %s20
          %s1265 = ssub.s32 768, 768
          %1266 = vsyncadd %s1255, %s1265
          %s1267 = smul.addr %s1262, 2
          %s1268 = sadd.s32 %s1263, %s1267
          %s1269 = smul.addr %s1268, 128
          %s1270 = scalar_lea.hbm %s1, %s1269
          %s1271 = sshll.u32 %s1258, 4
          %s1272 = int_to_ptr.vmem [resolvable:$true] %s1271
          %1277 = dma.vmem_to_hbm [thread:$0]  %s1272, 768, %s1270, %s1255, 128, 128, 8
        $region28: #{tpu_custom_call.1} parent=23 // pred_fallthru
          _
      $region24: #{tpu_custom_call.1} parent=5 // pred_fallthru
        _
      %p1278 = scmp.le.s32.totalorder 2, %s10
      // Predicated region
      $region29: #{tpu_custom_call.1} parent=5 // pred_check
        %p1279 = pneg %p1278
      $region30: #{tpu_custom_call.1} parent=5 // pred_check_branch
        %1281 = sbr.rel (%p1279) target = $region32
      $region31: #{tpu_custom_call.1} parent=5 // pred_region
        %s1282 = ssub.s32 %s10, 2
        // Predicated region
        $region33: #{tpu_custom_call.1} parent=31 // pred_check
          %p1283 = pneg %p81
        $region34: #{tpu_custom_call.1} parent=31 // pred_check_branch
          %1285 = sbr.rel (%p1283) target = $region36
        $region35: #{tpu_custom_call.1} parent=31 // pred_region
          %s1286 = sand.u32 %s66, 1
          %s1287 = scalar_lea.sflag [#allocation3], %s1286
          %s1288 = sand.u32 %s66, 1
          %s1289 = smul.addr %s1288, 48
          %s1290 = scalar_lea.vmem [#allocation2], %s1289
          %1291 = dma.done %s1287, 768
        $region36: #{tpu_custom_call.1} parent=31 // pred_fallthru
          _
      $region32: #{tpu_custom_call.1} parent=5 // pred_fallthru
        _
    $region6: #{tpu_custom_call.1} parent=1 // loop_footer
      %s14 = sadd.s32 1, %s10
    $region7: #{tpu_custom_call.1} parent=1 // loop_footer_branch
      %9 = sbr.rel target = $region3
    $region8: #{tpu_custom_call.1} parent=1 // loop_exit
      _
    %1292 = vsyncpa [#allocation3], 1
    %s1293 = scalar_lea.sflag [#allocation3], 1
    %1294 = vsyncpa %s1293, 1

</llo_original>
